<compile_context>
chip_gen: v7x
topology: tpu7x:2x2x1
jax: 0.10.0
libtpu: 0.0.40
codegen_flags: <defaults>
</compile_context>

<pallas_src>
import functools

import numpy as np
import jax
import jax.numpy as jnp
from jax.experimental import pallas as pl
from jax.experimental.pallas import tpu as pltpu


def _round_up(x, m):
    return ((x + m - 1) // m) * m


# ----------------------------------------------------------------------------
# Kernel 1: fused GRU cell (f32 gate math).  All operands resident in VMEM.
# Emits the new hidden state twice: f32 (state carry, aliases padded H0) and
# score-dtype (so the scoring kernel never re-casts it per NY tile).
# ----------------------------------------------------------------------------
def gru_cell_kernel(e_ref, h_ref, wih_t_ref, whh_t_ref, bih_ref, bhh_ref,
                    h_out_ref, h_score_ref):
    e = e_ref[...]                      # [Bp, Hp] f32
    h = h_ref[...]                      # [Bp, Hp] f32
    hid = h.shape[1]                    # Hp (multiple of 128)

    # gates_x = E @ W_ih.T + b_ih ; gates_h = H @ W_hh.T + b_hh   (both [Bp, 3*Hp])
    gx = jnp.dot(e, wih_t_ref[...], preferred_element_type=jnp.float32) + bih_ref[...]
    gh = jnp.dot(h, whh_t_ref[...], preferred_element_type=jnp.float32) + bhh_ref[...]

    # PyTorch GRUCell gate order (r, z, n); slices land exactly on 128-lane boundaries.
    r = jax.nn.sigmoid(gx[:, :hid] + gh[:, :hid])
    z = jax.nn.sigmoid(gx[:, hid:2 * hid] + gh[:, hid:2 * hid])
    n = jnp.tanh(gx[:, 2 * hid:] + r * gh[:, 2 * hid:])

    h_new = n + z * (h - n)             # == (1-z)*n + z*h, one fewer VPU op
    h_out_ref[...] = h_new
    h_score_ref[...] = h_new.astype(h_score_ref.dtype)


# ----------------------------------------------------------------------------
# Kernel 2: item scoring, gridded over NY tiles.  R_tile = h @ O_tile.T + B_tile
# Contraction on the last dims -> O stays row-major [tile, Hp]; the MXU handles
# the transpose for free.  h arrives pre-cast to O's dtype (hoisted cast).
# ----------------------------------------------------------------------------
def score_kernel(h_ref, o_ref, b_ref, r_ref):
    r_ref[...] = (
        jax.lax.dot_general(
            h_ref[...], o_ref[...],
            dimension_numbers=(((1,), (1,)), ((), ())),
            preferred_element_type=jnp.float32,
        )
        + b_ref[...]
    )


# ----------------------------------------------------------------------------
# Parameters: compatibility-mode init + one-time padding / pre-transposition.
# ----------------------------------------------------------------------------
def _init_numpy_weights(rng, shape):
    sigma = np.sqrt(6.0 / (shape[0] + shape[1]))
    return rng.rand(*shape).astype(np.float32) * 2.0 * sigma - sigma


def make_params(n_items, hidden, seed=42, score_dtype=jnp.bfloat16,
                include_reference=True):
    """Compatibility-mode init + kernel-ready (padded / pre-transposed) tensors.

    `score_dtype` is the storage dtype of the SINGLE padded item table; it is also the
    operand dtype of the scoring GEMM (accumulation stays f32).  The unpadded f32 copies
    are only built when `include_reference=True` (for the pure-JAX reference check).
    """
    rng = np.random.RandomState(seed)
    # GRUCell weight_ih / weight_hh: [3H, H] built by vstacking 3 [H, H] blocks, biases zero.
    wih = np.vstack([_init_numpy_weights(rng, (hidden, hidden)) for _ in range(3)])
    whh = np.vstack([_init_numpy_weights(rng, (hidden, hidden)) for _ in range(3)])
    bih = np.zeros((3 * hidden,), np.float32)
    bhh = np.zeros((3 * hidden,), np.float32)
    wy = _init_numpy_weights(rng, (n_items, hidden))      # Wy embedding [n_items, H]
    by = np.zeros((n_items, 1), np.float32)               # By embedding [n_items, 1]

    hp = _round_up(hidden, 128)                           # padded hidden (lane-aligned)

    def pad_gru_weight_t(w):  # [3H, H] -> transposed + per-gate padded [Hp, 3*Hp]
        wt = w.T                                          # [H, 3H], gate order r|z|n
        out = np.zeros((hp, 3 * hp), np.float32)
        for g in range(3):
            out[:hidden, g * hp:g * hp + hidden] = wt[:, g * hidden:(g + 1) * hidden]
        return out

    def pad_gru_bias(b):       # [3H] -> [1, 3*Hp] with per-gate padding
        out = np.zeros((1, 3 * hp), np.float32)
        for g in range(3):
            out[0, g * hp:g * hp + hidden] = b[g * hidden:(g + 1) * hidden]
        return out

    wy_pad = np.zeros((n_items, hp), np.float32)
    wy_pad[:, :hidden] = wy

    params = dict(
        # kernel-ready tensors (padded, pre-transposed, built once)
        wih_t=jnp.asarray(pad_gru_weight_t(wih)),         # [Hp, 3Hp] f32
        whh_t=jnp.asarray(pad_gru_weight_t(whh)),         # [Hp, 3Hp] f32
        bih2d=jnp.asarray(pad_gru_bias(bih)),             # [1, 3Hp]  f32
        bhh2d=jnp.asarray(pad_gru_bias(bhh)),             # [1, 3Hp]  f32
        wy_pad=jnp.asarray(wy_pad, dtype=score_dtype),    # [n_items, Hp] single item table
        by_flat=jnp.asarray(by.reshape(-1)),              # [n_items] f32
    )
    if include_reference:
        # unpadded f32 copies — only used by the pure-JAX reference (not the kernel path)
        params.update(wih=jnp.asarray(wih), whh=jnp.asarray(whh),
                      bih=jnp.asarray(bih), bhh=jnp.asarray(bhh),
                      wy=jnp.asarray(wy), by=jnp.asarray(by))
    return params


# ----------------------------------------------------------------------------
# Tile / VMEM budgeting for the scoring grid (v7x-safe by default).
# ----------------------------------------------------------------------------
def _pick_tile_and_vmem(ny, hp, bp, sbytes, tile_ny, vmem_budget):
    nyp128 = _round_up(max(ny, 1), 128)
    # double-buffered O tile + double-buffered R tile + double-buffered bias tile, per row:
    per_row = 2 * (hp * sbytes + bp * 4 + 4)
    fixed = 2 * bp * hp * sbytes                     # revisited h block
    cap = max(128, ((vmem_budget - fixed) // per_row) // 128 * 128)
    tile = min(_round_up(tile_ny, 128), cap, nyp128)
    # Keep >= 2 grid steps whenever there is enough work so v7x's two TensorCores both run.
    if nyp128 >= 256:
        tile = min(tile, _round_up((nyp128 + 1) // 2, 128))
    nyp = _round_up(ny, tile)
    vmem = per_row * tile + fixed + (2 << 20)        # actual use + margin
    return tile, nyp, int(vmem)


# ----------------------------------------------------------------------------
# Forward wrapper.
# ----------------------------------------------------------------------------
@functools.partial(jax.jit,
                   static_argnames=("tile_ny", "vmem_budget", "return_padded"))
def gru4rec_forward(params, X, H0, Y, *, tile_ny=8192,
                    vmem_budget=24 * 1024 * 1024, return_padded=False):
    """X:[B] int32, H0:[B,hidden] f32, Y:[NY] int32 -> (R, new_H).

    return_padded=False: R:[B,NY] f32, new_H:[B,hidden] f32 (incurs one slice copy of R).
    return_padded=True : R:[Bp,NYp] f32, new_H:[Bp,Hp] f32 — no slice copy; rows >= B and
                         columns >= NY / hidden are padding the caller must ignore.
    """
    B, hidden = H0.shape
    ny = Y.shape[0]
    table = params["wy_pad"]
    hp = table.shape[1]                                   # padded hidden
    sdtype = table.dtype
    sbytes = jnp.dtype(sdtype).itemsize
    bp = _round_up(B, 8)                                  # padded batch (sublane)
    tile, nyp, score_vmem = _pick_tile_and_vmem(ny, hp, bp, sbytes, tile_ny, vmem_budget)

    # ---- pad ids / hidden state (all pads static) ----
    Xp = jnp.zeros((bp,), jnp.int32).at[:B].set(X)
    Yp = jnp.zeros((nyp,), jnp.int32).at[:ny].set(Y)
    H0p = jnp.zeros((bp, hp), jnp.float32).at[:B, :hidden].set(H0)

    # ---- embedding gathers (plain XLA) ----
    # TODO(synk): fuse the Wy[Y] gather into the scoring kernel (scalar-prefetch Yp + manual
    # per-row DMAs on a pl.ANY table ref) once the per-descriptor issue cost can be amortised;
    # at Hp=128 each row is only 256 B so descriptor-per-row gather costs more than the
    # ~2.8x HBM-byte saving it buys.
    E = table[Xp].astype(jnp.float32)                     # [Bp, Hp]  constrained embedding
    O = table[Yp]                                         # [NYp, Hp] score dtype, row-major
    Bsc = params["by_flat"][Yp].reshape(1, nyp)           # [1, NYp]  f32

    # ---- kernel 1: GRU cell (f32 gate math); explicit VMEM limit so the resident
    # [Hp,3Hp] weights still fit under v5e's 16 MiB scoped default for larger hidden sizes.
    gru_vmem = int(1.5 * (2 * bp * hp * 4                 # E, H0p
                          + 2 * hp * 3 * hp * 4           # wih_t, whh_t
                          + 2 * 3 * hp * 4                # biases
                          + bp * hp * 4                   # h_new out
                          + bp * hp * sbytes)) + (4 << 20)
    h_new, h_score = pl.pallas_call(
        gru_cell_kernel,
        out_shape=(jax.ShapeDtypeStruct((bp, hp), jnp.float32),
                   jax.ShapeDtypeStruct((bp, hp), sdtype)),
        in_specs=[pl.BlockSpec(memory_space=pltpu.MemorySpace.VMEM)] * 6,
        out_specs=(pl.BlockSpec(memory_space=pltpu.MemorySpace.VMEM),
                   pl.BlockSpec(memory_space=pltpu.MemorySpace.VMEM)),
        input_output_aliases={1: 0},                      # h_new overwrites padded H0 buffer
        compiler_params=pltpu.CompilerParams(
            vmem_limit_bytes=min(gru_vmem, 100 << 20)),
    )(E, H0p, params["wih_t"], params["whh_t"], params["bih2d"], params["bhh2d"])

    # ---- kernel 2: scoring, gridded over NY tiles (double-buffered O tiles, megacore-parallel).
    # If xprof still shows exposed O-tile DMA on v7x, add pipeline_mode=pl.Buffered(3) to the
    # O BlockSpec (and re-check the VMEM budget).
    R = pl.pallas_call(
        score_kernel,
        out_shape=jax.ShapeDtypeStruct((bp, nyp), jnp.float32),
        grid=(nyp // tile,),
        in_specs=[
            pl.BlockSpec((bp, hp), lambda j: (0, 0)),     # h (score dtype): DMA'd once, revisited
            pl.BlockSpec((tile, hp), lambda j: (j, 0)),   # O tile (row-major, no transpose)
            pl.BlockSpec((1, tile), lambda j: (0, j)),    # bias tile
        ],
        out_specs=pl.BlockSpec((bp, tile), lambda j: (0, j)),
        compiler_params=pltpu.CompilerParams(
            dimension_semantics=("parallel",),
            vmem_limit_bytes=score_vmem,
        ),
    )(h_score, O, Bsc)

    if return_padded:
        return R, h_new
    return R[:B, :ny], h_new[:B, :hidden]


# ----------------------------------------------------------------------------
# Pure-JAX reference for validation (unpadded, f32).
# ----------------------------------------------------------------------------
def gru4rec_forward_ref(params, X, H0, Y):
    E = params["wy"][X]
    O = params["wy"][Y]
    Bsc = params["by"][Y]
    hid = H0.shape[1]
    gx = E @ params["wih"].T + params["bih"]
    gh = H0 @ params["whh"].T + params["bhh"]
    r = jax.nn.sigmoid(gx[:, :hid] + gh[:, :hid])
    z = jax.nn.sigmoid(gx[:, hid:2 * hid] + gh[:, hid:2 * hid])
    n = jnp.tanh(gx[:, 2 * hid:] + r * gh[:, 2 * hid:])
    h_new = (1.0 - z) * n + z * H0
    R = h_new @ O.T + Bsc.T
    return R, h_new


if __name__ == "__main__":
    n_items, hidden, batch, n_y = 200, 100, 6, 300   # hidden pads 100 -> 128

    key = jax.random.PRNGKey(0)
    kx, ky, kh = jax.random.split(key, 3)
    X = jax.random.randint(kx, (batch,), 0, n_items, dtype=jnp.int32)
    Y = jax.random.randint(ky, (n_y,), 0, n_items, dtype=jnp.int32)
    H0 = jax.random.normal(kh, (batch, hidden), dtype=jnp.float32) * 0.1

    # Strict f32 path (f32 item table); tile_ny=128 exercises a 3-step scoring grid.
    params_f32 = make_params(n_items, hidden, seed=42, score_dtype=jnp.float32)
    R_ref, H_ref = gru4rec_forward_ref(params_f32, X, H0, Y)
    R32, H32 = gru4rec_forward(params_f32, X, H0, Y, tile_ny=128)
    jax.block_until_ready((R32, H32))
    np.testing.assert_allclose(np.asarray(H32), np.asarray(H_ref), rtol=1e-4, atol=1e-4)
    np.testing.assert_allclose(np.asarray(R32), np.asarray(R_ref), rtol=1e-4, atol=1e-4)

    # Production path: SINGLE bf16 item table (bf16 scoring operands, f32 accumulation),
    # auto-sized tiles with the >=2-step megacore guarantee.
    params_bf = make_params(n_items, hidden, seed=42, score_dtype=jnp.bfloat16,
                            include_reference=False)
    Rbf, Hbf = gru4rec_forward(params_bf, X, H0, Y)
    jax.block_until_ready((Rbf, Hbf))
    np.testing.assert_allclose(np.asarray(Hbf), np.asarray(H_ref), rtol=2e-2, atol=2e-2)
    np.testing.assert_allclose(np.asarray(Rbf), np.asarray(R_ref), rtol=2e-2, atol=2e-2)

    # Padded-return path (skips the final slice copies); validate the logical sub-block.
    Rp, Hpad = gru4rec_forward(params_bf, X, H0, Y, return_padded=True)
    jax.block_until_ready((Rp, Hpad))
    np.testing.assert_allclose(np.asarray(Rp[:batch, :n_y]), np.asarray(R_ref),
                               rtol=2e-2, atol=2e-2)
    np.testing.assert_allclose(np.asarray(Hpad[:batch, :hidden]), np.asarray(H_ref),
                               rtol=2e-2, atol=2e-2)

    print("KERNEL_OK")
</pallas_src>

<mosaic_0001>
module attributes {stable_mosaic.version = 11 : i64} {
  func.func @gru_cell_kernel(%arg0: memref<8x128xf32, #tpu.memory_space<vmem>>, %arg1: memref<8x128xf32, #tpu.memory_space<vmem>>, %arg2: memref<128x384xf32, #tpu.memory_space<vmem>>, %arg3: memref<128x384xf32, #tpu.memory_space<vmem>>, %arg4: memref<1x384xf32, #tpu.memory_space<vmem>>, %arg5: memref<1x384xf32, #tpu.memory_space<vmem>>, %arg6: memref<8x128xf32, #tpu.memory_space<vmem>>, %arg7: memref<8x128xf32, #tpu.memory_space<vmem>>) attributes {dimension_semantics = [], scalar_prefetch = 0 : i64, scratch_operands = 0 : i64, tpu.core_type = #tpu.core_type<tc>} {
    %c0 = arith.constant 0 : index
    %c0_0 = arith.constant 0 : index
    %0 = vector.load %arg0[%c0, %c0_0] : memref<8x128xf32, #tpu.memory_space<vmem>>, vector<8x128xf32>
    %c0_1 = arith.constant 0 : index
    %c0_2 = arith.constant 0 : index
    %1 = vector.load %arg1[%c0_1, %c0_2] : memref<8x128xf32, #tpu.memory_space<vmem>>, vector<8x128xf32>
    %c0_3 = arith.constant 0 : index
    %c0_4 = arith.constant 0 : index
    %2 = vector.load %arg2[%c0_3, %c0_4] : memref<128x384xf32, #tpu.memory_space<vmem>>, vector<128x384xf32>
    %cst = arith.constant dense<0.000000e+00> : vector<8x384xf32>
    %3 = tpu.matmul %0, %2, %cst {dimension_numbers = #tpu.dot_dimension_numbers<[1], [0], [0], [1], [0, 0, 1, 1], [], []>} : vector<8x128xf32>, vector<128x384xf32>, vector<8x384xf32> -> vector<8x384xf32>
    %c0_5 = arith.constant 0 : index
    %c0_6 = arith.constant 0 : index
    %4 = vector.load %arg4[%c0_5, %c0_6] : memref<1x384xf32, #tpu.memory_space<vmem>>, vector<1x384xf32>
    %5 = vector.broadcast %4 : vector<1x384xf32> to vector<8x384xf32>
    %6 = arith.addf %3, %5 : vector<8x384xf32>
    %c0_7 = arith.constant 0 : index
    %c0_8 = arith.constant 0 : index
    %7 = vector.load %arg3[%c0_7, %c0_8] : memref<128x384xf32, #tpu.memory_space<vmem>>, vector<128x384xf32>
    %cst_9 = arith.constant dense<0.000000e+00> : vector<8x384xf32>
    %8 = tpu.matmul %1, %7, %cst_9 {dimension_numbers = #tpu.dot_dimension_numbers<[1], [0], [0], [1], [0, 0, 1, 1], [], []>} : vector<8x128xf32>, vector<128x384xf32>, vector<8x384xf32> -> vector<8x384xf32>
    %c0_10 = arith.constant 0 : index
    %c0_11 = arith.constant 0 : index
    %9 = vector.load %arg5[%c0_10, %c0_11] : memref<1x384xf32, #tpu.memory_space<vmem>>, vector<1x384xf32>
    %10 = vector.broadcast %9 : vector<1x384xf32> to vector<8x384xf32>
    %11 = arith.addf %8, %10 : vector<8x384xf32>
    %12 = vector.extract_strided_slice %6 {offsets = [0, 0], sizes = [8, 128], strides = [1, 1]} : vector<8x384xf32> to vector<8x128xf32>
    %13 = vector.extract_strided_slice %11 {offsets = [0, 0], sizes = [8, 128], strides = [1, 1]} : vector<8x384xf32> to vector<8x128xf32>
    %14 = arith.addf %12, %13 : vector<8x128xf32>
    %15 = arith.negf %14 : vector<8x128xf32>
    %16 = math.exp %15 : vector<8x128xf32>
    %cst_12 = arith.constant 1.000000e+00 : f32
    %17 = vector.broadcast %cst_12 : f32 to vector<8x128xf32>
    %18 = arith.addf %17, %16 : vector<8x128xf32>
    %19 = arith.divf %17, %18 : vector<8x128xf32>
    %20 = vector.extract_strided_slice %6 {offsets = [0, 128], sizes = [8, 128], strides = [1, 1]} : vector<8x384xf32> to vector<8x128xf32>
    %21 = vector.extract_strided_slice %11 {offsets = [0, 128], sizes = [8, 128], strides = [1, 1]} : vector<8x384xf32> to vector<8x128xf32>
    %22 = arith.addf %20, %21 : vector<8x128xf32>
    %23 = arith.negf %22 : vector<8x128xf32>
    %24 = math.exp %23 : vector<8x128xf32>
    %cst_13 = arith.constant 1.000000e+00 : f32
    %25 = vector.broadcast %cst_13 : f32 to vector<8x128xf32>
    %26 = arith.addf %25, %24 : vector<8x128xf32>
    %27 = arith.divf %25, %26 : vector<8x128xf32>
    %28 = vector.extract_strided_slice %6 {offsets = [0, 256], sizes = [8, 128], strides = [1, 1]} : vector<8x384xf32> to vector<8x128xf32>
    %29 = vector.extract_strided_slice %11 {offsets = [0, 256], sizes = [8, 128], strides = [1, 1]} : vector<8x384xf32> to vector<8x128xf32>
    %30 = arith.mulf %19, %29 : vector<8x128xf32>
    %31 = arith.addf %28, %30 : vector<8x128xf32>
    %32 = math.tanh %31 : vector<8x128xf32>
    %33 = arith.subf %1, %32 : vector<8x128xf32>
    %34 = arith.mulf %27, %33 : vector<8x128xf32>
    %35 = arith.addf %32, %34 : vector<8x128xf32>
    %c0_14 = arith.constant 0 : index
    %c0_15 = arith.constant 0 : index
    %36 = vector.load %arg6[%c0_14, %c0_15] : memref<8x128xf32, #tpu.memory_space<vmem>>, vector<8x128xf32>
    tpu.vector_store %arg6[%c0_14, %c0_15], %35 {strides = array<i32>} : memref<8x128xf32, #tpu.memory_space<vmem>>, vector<8x128xf32>,
    %c0_16 = arith.constant 0 : index
    %c0_17 = arith.constant 0 : index
    %37 = vector.load %arg7[%c0_16, %c0_17] : memref<8x128xf32, #tpu.memory_space<vmem>>, vector<8x128xf32>
    tpu.vector_store %arg7[%c0_16, %c0_17], %35 {strides = array<i32>} : memref<8x128xf32, #tpu.memory_space<vmem>>, vector<8x128xf32>,
    return
  }
}

module attributes {stable_mosaic.version = 11 : i64} {
  func.func @score_kernel(%arg0: i32, %arg1: memref<8x128xf32, #tpu.memory_space<vmem>>, %arg2: memref<128x128xf32, #tpu.memory_space<vmem>>, %arg3: memref<1x128xf32, #tpu.memory_space<vmem>>, %arg4: memref<8x128xf32, #tpu.memory_space<vmem>>) attributes {dimension_semantics = [#tpu.dimension_semantics<parallel>], iteration_bounds = array<i64: 3>, scalar_prefetch = 0 : i64, scratch_operands = 0 : i64, tpu.core_type = #tpu.core_type<tc>, window_params = [{pipeline_mode = #tpu.pipeline_mode<synchronous>, transform_indices = @transform_0, window_bounds = array<i64: 8, 128>}, {transform_indices = @transform_1, window_bounds = array<i64: 128, 128>}, {transform_indices = @transform_2, window_bounds = array<i64: 1, 128>}, {transform_indices = @transform_3, window_bounds = array<i64: 8, 128>}]} {
    %c0 = arith.constant 0 : index
    %c0_0 = arith.constant 0 : index
    %0 = vector.load %arg1[%c0, %c0_0] : memref<8x128xf32, #tpu.memory_space<vmem>>, vector<8x128xf32>
    %c0_1 = arith.constant 0 : index
    %c0_2 = arith.constant 0 : index
    %1 = vector.load %arg2[%c0_1, %c0_2] : memref<128x128xf32, #tpu.memory_space<vmem>>, vector<128x128xf32>
    %cst = arith.constant dense<0.000000e+00> : vector<8x128xf32>
    %2 = tpu.matmul %0, %1, %cst {dimension_numbers = #tpu.dot_dimension_numbers<[1], [1], [0], [0], [0, 0, 1, 0], [], []>} : vector<8x128xf32>, vector<128x128xf32>, vector<8x128xf32> -> vector<8x128xf32>
    %c0_3 = arith.constant 0 : index
    %c0_4 = arith.constant 0 : index
    %3 = vector.load %arg3[%c0_3, %c0_4] : memref<1x128xf32, #tpu.memory_space<vmem>>, vector<1x128xf32>
    %4 = vector.broadcast %3 : vector<1x128xf32> to vector<8x128xf32>
    %5 = arith.addf %2, %4 : vector<8x128xf32>
    %c0_5 = arith.constant 0 : index
    %c0_6 = arith.constant 0 : index
    %6 = vector.load %arg4[%c0_5, %c0_6] : memref<8x128xf32, #tpu.memory_space<vmem>>, vector<8x128xf32>
    tpu.vector_store %arg4[%c0_5, %c0_6], %5 {strides = array<i32>} : memref<8x128xf32, #tpu.memory_space<vmem>>, vector<8x128xf32>,
    return
  }
  func.func @transform_0(%arg0: i32) -> (i32, i32) {
    %c0_i32 = arith.constant 0 : i32
    %c0_i32_0 = arith.constant 0 : i32
    %c0_i32_1 = arith.constant 0 : i32
    return %c0_i32, %c0_i32_0 : i32, i32
  }
  func.func @transform_1(%arg0: i32) -> (i32, i32) {
    %c0_i32 = arith.constant 0 : i32
    %c0_i32_0 = arith.constant 0 : i32
    return %arg0, %c0_i32 : i32, i32
  }
  func.func @transform_2(%arg0: i32) -> (i32, i32) {
    %c0_i32 = arith.constant 0 : i32
    %c0_i32_0 = arith.constant 0 : i32
    return %c0_i32, %arg0 : i32, i32
  }
  func.func @transform_3(%arg0: i32) -> (i32, i32) {
    %c0_i32 = arith.constant 0 : i32
    %c0_i32_0 = arith.constant 0 : i32
    return %c0_i32, %arg0 : i32, i32
  }
}

</mosaic_0001>

<llo_original>
// kernel: gru4rec_forward.3
$region0: #{gru4rec_forward.3}
  #allocation0 [shape = 'u32[]', space=smem, size = 0x4, offset = 0x4, fixed_abs, tag = 'smem constant byte address 0x4 - core index']
  #allocation1 [shape = 'u32[144,128]{1,0:T(1,128)}', space=vmem, size = 0x12000, scoped, tag = 'internal scratch']
  %s0 = inlined_call_operand.vmem [shape: f32[8,128], index: 0, kind: input, shape index: {}]
  %s1 = inlined_call_operand.vmem [shape: f32[384,128], index: 1, kind: input, shape index: {}]
  %s2 = inlined_call_operand.vmem [shape: f32[1,384], index: 2, kind: input, shape index: {}]
  %s3 = inlined_call_operand.hbm [shape: f32[8,384], index: 3, kind: output, shape index: {}]
  %s4 = sld [smem:[#allocation0]]
  $region45: #{gru4rec_forward.3} parent=0
    _
  %s6 = ssub.s32 1, %s4
  %s7 = scalar_select 0, %s6, %s4
  $region1: #{gru4rec_forward.3} parent=0
    #allocation2 [shape = 'u8[8192]{0}', space=vmem, size = 0x2000, scoped, tag = 'output window, operand 0']
    #allocation3 [shape = 's32[2]{0}', space=sflag, size = 0x8, scoped, tag = 'scoped memory for gru4rec_forward.3']
    %8 = vsyncpa [#allocation3], 0
    %s9 = scalar_lea.sflag [#allocation3], 1
    %10 = vsyncpa %s9, 0
    loop: start=0, step=1, limit=5
    $region2: #{gru4rec_forward.3} parent=1 // loop_pre_header
      _
    $region3: #{gru4rec_forward.3} parent=1 // loop_header
      %s12 = sphi 0, %s16
      %p13 = scmp.ge.s32.totalorder %s12, 5
      %s20 = sphi 0, %s20
      %s22 = sphi 0, %s20
      %s23 = sphi 0, %s22
      %s37 = sphi 0, %s23
      %s43 = sphi 0, %s45
      %s46 = sphi 0, %s43
      %s47 = sphi 0, %s46
      %s63 = sphi 0, %s47
      %s69 = sphi 0, %s71
      %s72 = sphi 0, %s69
      %s73 = sphi 0, %s72
      %s89 = sphi 0, %s73
      %s95 = sphi 0, %s97
      %s98 = sphi 0, %s95
      %s99 = sphi 0, %s98
      %s115 = sphi 0, %s99
    $region4: #{gru4rec_forward.3} parent=1 // loop_header_branch
      %15 = sbr.rel (%p13) target = $region8
    $region5: #{gru4rec_forward.3} parent=1 // loop_body
      %s17 = ssub.s32 %s12, 1
      %s18 = ssub.s32 %s12, 2
      %s19 = sadd.s32 %s12, 1
      %s21 = sadd.s32 %s20, 1
      %p24 = scmp.eq.s32.totalorder %s12, 2
      %p25 = scmp.ne.s32.totalorder %s20, %s22
      %p26 = scmp.eq.s32.totalorder %s12, 0
      %p27 = por %p25, %p26
      %p28 = scmp.ne.s32.totalorder %s20, %s22
      %p29 = scmp.eq.s32.totalorder %s17, 2
      %p30 = por %p28, %p29
      %p31 = scmp.ne.s32.totalorder %s22, %s23
      %p32 = scmp.eq.s32.totalorder %s17, 0
      %p33 = por %p31, %p32
      %p34 = scmp.ne.s32.totalorder %s22, %s23
      %p35 = scmp.eq.s32.totalorder %s18, 2
      %p36 = por %p34, %p35
      %p38 = scmp.ne.s32.totalorder %s23, %s37
      %p39 = scmp.eq.s32.totalorder %s18, 0
      %p40 = por %p38, %p39
      %s41 = ssub.s32 %s12, %s19
      %p42 = scmp.eq.s32.totalorder %s41, 0
      %s44 = sadd.s32 %s43, 1
      %s45 = scalar_select %p42, %s43, %s44
      %p48 = pneg %p42
      %p49 = scmp.eq.s32.totalorder %s12, 2
      %p50 = por %p48, %p49
      %p51 = scmp.ne.s32.totalorder %s43, %s46
      %p52 = scmp.eq.s32.totalorder %s12, 0
      %p53 = por %p51, %p52
      %p54 = scmp.ne.s32.totalorder %s43, %s46
      %p55 = scmp.eq.s32.totalorder %s17, 2
      %p56 = por %p54, %p55
      %p57 = scmp.ne.s32.totalorder %s46, %s47
      %p58 = scmp.eq.s32.totalorder %s17, 0
      %p59 = por %p57, %p58
      %p60 = scmp.ne.s32.totalorder %s46, %s47
      %p61 = scmp.eq.s32.totalorder %s18, 2
      %p62 = por %p60, %p61
      %p64 = scmp.ne.s32.totalorder %s47, %s63
      %p65 = scmp.eq.s32.totalorder %s18, 0
      %p66 = por %p64, %p65
      %s67 = ssub.s32 %s12, %s19
      %p68 = scmp.eq.s32.totalorder %s67, 0
      %s70 = sadd.s32 %s69, 1
      %s71 = scalar_select %p68, %s69, %s70
      %p74 = pneg %p68
      %p75 = scmp.eq.s32.totalorder %s12, 2
      %p76 = por %p74, %p75
      %p77 = scmp.ne.s32.totalorder %s69, %s72
      %p78 = scmp.eq.s32.totalorder %s12, 0
      %p79 = por %p77, %p78
      %p80 = scmp.ne.s32.totalorder %s69, %s72
      %p81 = scmp.eq.s32.totalorder %s17, 2
      %p82 = por %p80, %p81
      %p83 = scmp.ne.s32.totalorder %s72, %s73
      %p84 = scmp.eq.s32.totalorder %s17, 0
      %p85 = por %p83, %p84
      %p86 = scmp.ne.s32.totalorder %s72, %s73
      %p87 = scmp.eq.s32.totalorder %s18, 2
      %p88 = por %p86, %p87
      %p90 = scmp.ne.s32.totalorder %s73, %s89
      %p91 = scmp.eq.s32.totalorder %s18, 0
      %p92 = por %p90, %p91
      %s93 = ssub.s32 %s12, %s19
      %p94 = scmp.eq.s32.totalorder %s93, 0
      %s96 = sadd.s32 %s95, 1
      %s97 = scalar_select %p94, %s95, %s96
      %p100 = pneg %p94
      %p101 = scmp.eq.s32.totalorder %s12, 2
      %p102 = por %p100, %p101
      %p103 = scmp.ne.s32.totalorder %s95, %s98
      %p104 = scmp.eq.s32.totalorder %s12, 0
      %p105 = por %p103, %p104
      %p106 = scmp.ne.s32.totalorder %s95, %s98
      %p107 = scmp.eq.s32.totalorder %s17, 2
      %p108 = por %p106, %p107
      %p109 = scmp.ne.s32.totalorder %s98, %s99
      %p110 = scmp.eq.s32.totalorder %s17, 0
      %p111 = por %p109, %p110
      %p112 = scmp.ne.s32.totalorder %s98, %s99
      %p113 = scmp.eq.s32.totalorder %s18, 2
      %p114 = por %p112, %p113
      %p116 = scmp.ne.s32.totalorder %s99, %s115
      %p117 = scmp.eq.s32.totalorder %s18, 0
      %p118 = por %p116, %p117
      %p119 = scmp.le.s32.totalorder 1, %s12
      %p120 = scmp.lt.s32.totalorder %s12, 4
      %p121 = pnand %p119, %p120
      %p122 = pneg %p121
      // Predicated region
      $region9: #{gru4rec_forward.3} parent=5 // pred_check
        _
      $region10: #{gru4rec_forward.3} parent=5 // pred_check_branch
        %124 = sbr.rel (%p121) target = $region12
      $region11: #{gru4rec_forward.3} parent=5 // pred_region
        %s125 = ssub.s32 %s12, 1
        // Predicated region
        $region13: #{gru4rec_forward.3} parent=11 // pred_check
          %p126 = pneg %p33
        $region14: #{gru4rec_forward.3} parent=11 // pred_check_branch
          %128 = sbr.rel (%p126) target = $region16
        $region15: #{gru4rec_forward.3} parent=11 // pred_region
          _
        $region16: #{gru4rec_forward.3} parent=11 // pred_fallthru
          _
      $region12: #{gru4rec_forward.3} parent=5 // pred_fallthru
        _
      %p129 = scmp.lt.s32.totalorder %s12, 3
      // Predicated region
      $region17: #{gru4rec_forward.3} parent=5 // pred_check
        %p130 = pneg %p129
      $region18: #{gru4rec_forward.3} parent=5 // pred_check_branch
        %132 = sbr.rel (%p130) target = $region20
      $region19: #{gru4rec_forward.3} parent=5 // pred_region
        // Predicated region
        $region21: #{gru4rec_forward.3} parent=19 // pred_check
          %p133 = pneg %p53
        $region22: #{gru4rec_forward.3} parent=19 // pred_check_branch
          %135 = sbr.rel (%p133) target = $region24
        $region23: #{gru4rec_forward.3} parent=19 // pred_region
          %s136 = smul.u32 16, %s12
          %p137 = scmp.lt.s32.totalorder %s136, 47
          %s138 = scalar_select %p137, %s136, 47
          %s139 = smul.addr %s138, 8
          %s140 = scalar_lea.vmem %s1, %s139
          %s141 = smul.u32 16, %s12
        $region24: #{gru4rec_forward.3} parent=19 // pred_fallthru
          _
        // Predicated region
        $region25: #{gru4rec_forward.3} parent=19 // pred_check
          %p142 = pneg %p79
        $region26: #{gru4rec_forward.3} parent=19 // pred_check_branch
          %144 = sbr.rel (%p142) target = $region28
        $region27: #{gru4rec_forward.3} parent=19 // pred_region
          %p145 = scmp.lt.s32.totalorder %s12, 2
          %s146 = scalar_select %p145, %s12, 2
          %s147 = scalar_lea.vmem %s2, %s146
        $region28: #{gru4rec_forward.3} parent=19 // pred_fallthru
          _
      $region20: #{gru4rec_forward.3} parent=5 // pred_fallthru
        _
      %p148 = scmp.le.s32.totalorder 1, %s12
      %p149 = scmp.lt.s32.totalorder %s12, 4
      %p150 = pnand %p148, %p149
      %p151 = pneg %p150
      // Predicated region
      $region29: #{gru4rec_forward.3} parent=5 // pred_check
        _
      $region30: #{gru4rec_forward.3} parent=5 // pred_check_branch
        %153 = sbr.rel (%p150) target = $region32
      $region31: #{gru4rec_forward.3} parent=5 // pred_region
        %s154 = ssub.s32 %s12, 1
        %p155 = pneg %p33
        %p156 = pneg %p30
        %s157 = smul.u32 16, %s17
        %p158 = scmp.lt.s32.totalorder %s157, 47
        %s159 = scalar_select %p158, %s157, 47
        %s160 = smul.addr %s159, 8
        %s161 = scalar_lea.vmem %s1, %s160
        %p162 = pneg %p59
        %p163 = pneg %p56
        %p164 = scmp.lt.s32.totalorder %s17, 2
        %s165 = scalar_select %p164, %s17, 2
        %s166 = scalar_lea.vmem %s2, %s165
        %p167 = pneg %p85
        %p168 = pneg %p82
        %p169 = pneg %p111
        %p170 = pneg %p108
        %s171 = sand.u32 %s98, 1
        %s172 = scalar_lea.sflag [#allocation3], %s171
        %s173 = sand.u32 %s98, 1
        %s174 = smul.addr %s173, 8
        %s175 = scalar_lea.vmem [#allocation2], %s174
        %s176 = smul.u32 16, %s17
        %p177 = scmp.lt.s32.totalorder %s176, 47
        %s178 = scalar_select %p177, %s176, 47
        %s179 = smul.addr %s178, 8
        %s180 = scalar_lea.vmem %s1, %s179
        %s181 = smul.u32 16, %s17
        %p182 = scmp.lt.s32.totalorder %s17, 2
        %s183 = scalar_select %p182, %s17, 2
        %s184 = scalar_lea.vmem %s2, %s183
        %v185 = vld [vmem:[%s0] sm:$0xff]
        %v186 = vld [vmem:[%s180] sm:$0xff]
        %v187 = vld [vmem:[%s180 + $0x8] sm:$0xff]
        %v188 = vld [vmem:[%s180 + $0x10] sm:$0xff]
        %v189 = vld [vmem:[%s180 + $0x18] sm:$0xff]
        %v190 = vld [vmem:[%s180 + $0x20] sm:$0xff]
        %v191 = vld [vmem:[%s180 + $0x28] sm:$0xff]
        %v192 = vld [vmem:[%s180 + $0x30] sm:$0xff]
        %v193 = vld [vmem:[%s180 + $0x38] sm:$0xff]
        %v194 = vld [vmem:[%s180 + $0x40] sm:$0xff]
        %v195 = vld [vmem:[%s180 + $0x48] sm:$0xff]
        %v196 = vld [vmem:[%s180 + $0x50] sm:$0xff]
        %v197 = vld [vmem:[%s180 + $0x58] sm:$0xff]
        %v198 = vld [vmem:[%s180 + $0x60] sm:$0xff]
        %v199 = vld [vmem:[%s180 + $0x68] sm:$0xff]
        %v200 = vld [vmem:[%s180 + $0x70] sm:$0xff]
        %v201 = vld [vmem:[%s180 + $0x78] sm:$0xff]
        %v202 = vld [vmem:[%s184] sm:$0x1]
        %v204 = vlaneseq
        %v205 = vshrl.u32 %v204, 7
        %v206 = vsub.s32 0, %v205
        %v207 = vrot.slane %v202, %v206
        %209 = vmatprep.subr.mxu0 0.0
        %210 = vmatpush1.xpose.msra.mxu0 %v186
        %211 = vmatprep.subr.mxu0 0.0
        %212 = vmatpush1.xpose.msra.mxu0 %v187
        %213 = vmatprep.subr.mxu0 0.0
        %214 = vmatpush1.xpose.msra.mxu0 %v188
        %215 = vmatprep.subr.mxu0 0.0
        %216 = vmatpush1.xpose.msra.mxu0 %v189
        %217 = vmatprep.subr.mxu0 0.0
        %218 = vmatpush1.xpose.msra.mxu0 %v190
        %219 = vmatprep.subr.mxu0 0.0
        %220 = vmatpush1.xpose.msra.mxu0 %v191
        %221 = vmatprep.subr.mxu0 0.0
        %222 = vmatpush1.xpose.msra.mxu0 %v192
        %223 = vmatprep.subr.mxu0 0.0
        %224 = vmatpush1.xpose.msra.mxu0 %v193
        %225 = vmatprep.subr.mxu0 0.0
        %226 = vmatpush1.xpose.msra.mxu0 %v194
        %227 = vmatprep.subr.mxu0 0.0
        %228 = vmatpush1.xpose.msra.mxu0 %v195
        %229 = vmatprep.subr.mxu0 0.0
        %230 = vmatpush1.xpose.msra.mxu0 %v196
        %231 = vmatprep.subr.mxu0 0.0
        %232 = vmatpush1.xpose.msra.mxu0 %v197
        %233 = vmatprep.subr.mxu0 0.0
        %234 = vmatpush1.xpose.msra.mxu0 %v198
        %235 = vmatprep.subr.mxu0 0.0
        %236 = vmatpush1.xpose.msra.mxu0 %v199
        %237 = vmatprep.subr.mxu0 0.0
        %238 = vmatpush1.xpose.msra.mxu0 %v200
        %239 = vmatprep.subr.mxu0 0.0
        %240 = vmatpush1.xpose.msra.mxu0 %v201
        %241 = vmatprep.subr.mxu0 0.0
        %242 = vmatpush1.xpose.msra.mxu0 0.0
        %243 = vmatprep.subr.mxu0 0.0
        %244 = vmatpush1.xpose.msra.mxu0 0.0
        %245 = vmatprep.subr.mxu0 0.0
        %246 = vmatpush1.xpose.msra.mxu0 0.0
        %247 = vmatprep.subr.mxu0 0.0
        %248 = vmatpush1.xpose.msra.mxu0 0.0
        %249 = vmatprep.subr.mxu0 0.0
        %250 = vmatpush1.xpose.msra.mxu0 0.0
        %251 = vmatprep.subr.mxu0 0.0
        %252 = vmatpush1.xpose.msra.mxu0 0.0
        %253 = vmatprep.subr.mxu0 0.0
        %254 = vmatpush1.xpose.msra.mxu0 0.0
        %255 = vmatprep.subr.mxu0 0.0
        %256 = vmatpush1.xpose.msra.mxu0 0.0
        %257 = vmatprep.subr.mxu0 0.0
        %258 = vmatpush1.xpose.msra.mxu0 0.0
        %259 = vmatprep.subr.mxu0 0.0
        %260 = vmatpush1.xpose.msra.mxu0 0.0
        %261 = vmatprep.subr.mxu0 0.0
        %262 = vmatpush1.xpose.msra.mxu0 0.0
        %263 = vmatprep.subr.mxu0 0.0
        %264 = vmatpush1.xpose.msra.mxu0 0.0
        %265 = vmatprep.subr.mxu0 0.0
        %266 = vmatpush1.xpose.msra.mxu0 0.0
        %267 = vmatprep.subr.mxu0 0.0
        %268 = vmatpush1.xpose.msra.mxu0 0.0
        %269 = vmatprep.subr.mxu0 0.0
        %270 = vmatpush1.xpose.msra.mxu0 0.0
        %271 = vmatprep.subr.mxu0 0.0
        %272 = vmatpush1.xpose.msra.mxu0 0.0
        %273 = vmatprep.mubr.f32.mxu0 0.0
        %274 = vmatmul.mubr.f32.gmra.mrb[0].mxu0 %v185
        %v275 = vpop.f32.mrb[0].mxu0
        %v276 = vadd.f32 %v207, %v275
        %v277 = vpop.f32.mrb[0].mxu0
        %278 = vdwg.mxu0
        %279 = vst [vmem:[%s175] sm:$0xff] %v276
        %s280 = sand.u32 %s98, 1
        %s281 = scalar_lea.sflag [#allocation3], %s280
        %s282 = sand.u32 %s98, 1
        %s283 = smul.addr %s282, 8
        %s284 = scalar_lea.vmem [#allocation2], %s283
        // Predicated region
        $region33: #{gru4rec_forward.3} parent=31 // pred_check
          %p285 = pneg %p108
        $region34: #{gru4rec_forward.3} parent=31 // pred_check_branch
          %287 = sbr.rel (%p285) target = $region36
        $region35: #{gru4rec_forward.3} parent=31 // pred_region
          %s289 = ssub.s32 128, 128
          %290 = vsyncadd %s281, %s289
          %s291 = smul.addr %s17, 128
          %s292 = scalar_lea.hbm %s3, %s291
          %s294 = sshll.u32 %s284, 4
          %s295 = int_to_ptr.vmem [resolvable:$true] %s294
          %297 = dma.vmem_to_hbm [thread:$0]  %s295, 128, %s292, %s281
        $region36: #{gru4rec_forward.3} parent=31 // pred_fallthru
          _
      $region32: #{gru4rec_forward.3} parent=5 // pred_fallthru
        _
      %p298 = scmp.le.s32.totalorder 2, %s12
      // Predicated region
      $region37: #{gru4rec_forward.3} parent=5 // pred_check
        %p299 = pneg %p298
      $region38: #{gru4rec_forward.3} parent=5 // pred_check_branch
        %301 = sbr.rel (%p299) target = $region40
      $region39: #{gru4rec_forward.3} parent=5 // pred_region
        %s302 = ssub.s32 %s12, 2
        // Predicated region
        $region41: #{gru4rec_forward.3} parent=39 // pred_check
          %p303 = pneg %p114
        $region42: #{gru4rec_forward.3} parent=39 // pred_check_branch
          %305 = sbr.rel (%p303) target = $region44
        $region43: #{gru4rec_forward.3} parent=39 // pred_region
          %s306 = sand.u32 %s99, 1
          %s307 = scalar_lea.sflag [#allocation3], %s306
          %s308 = sand.u32 %s99, 1
          %s309 = smul.addr %s308, 8
          %s310 = scalar_lea.vmem [#allocation2], %s309
          %311 = dma.done %s307, 128
        $region44: #{gru4rec_forward.3} parent=39 // pred_fallthru
          _
      $region40: #{gru4rec_forward.3} parent=5 // pred_fallthru
        _
    $region6: #{gru4rec_forward.3} parent=1 // loop_footer
      %s16 = sadd.s32 1, %s12
    $region7: #{gru4rec_forward.3} parent=1 // loop_footer_branch
      %11 = sbr.rel target = $region3
    $region8: #{gru4rec_forward.3} parent=1 // loop_exit
      _
    %312 = vsyncpa [#allocation3], 1
    %s313 = scalar_lea.sflag [#allocation3], 1
    %314 = vsyncpa %s313, 1

// kernel: gru4rec_forward.2
$region0: #{gru4rec_forward.2}
  #allocation0 [shape = 'u32[]', space=smem, size = 0x4, offset = 0x4, fixed_abs, tag = 'smem constant byte address 0x4 - core index']
  #allocation1 [shape = 'u32[144,128]{1,0:T(1,128)}', space=vmem, size = 0x12000, scoped, tag = 'internal scratch']
  %s0 = inlined_call_operand.vmem [shape: f32[8,128], index: 0, kind: input, shape index: {}]
  %s1 = inlined_call_operand.vmem [shape: f32[8,128], index: 1, kind: input, shape index: {}, may-alias: {1,6}]
  %s2 = inlined_call_operand.vmem [shape: f32[128,384], index: 2, kind: input, shape index: {}]
  %s3 = inlined_call_operand.vmem [shape: f32[128,384], index: 3, kind: input, shape index: {}]
  %s4 = inlined_call_operand.vmem [shape: f32[1,384], index: 4, kind: input, shape index: {}]
  %s5 = inlined_call_operand.vmem [shape: f32[1,384], index: 5, kind: input, shape index: {}]
  %s6 = inlined_call_operand.vmem [shape: f32[8,128], index: 6, kind: output, shape index: {0}, may-alias: {1,6}]
  %s7 = inlined_call_operand.vmem [shape: f32[8,128], index: 7, kind: output, shape index: {1}]
  %8 = xla_tuple %s6, %s7
  %s9 = sld [smem:[#allocation0]]
  $region42: #{gru4rec_forward.2} parent=0
    _
  %s11 = ssub.s32 1, %s9
  %s12 = scalar_select 0, %s11, %s9
  // Predicated region
  $region2: #{gru4rec_forward.2} parent=0 // pred_check
    _
  $region3: #{gru4rec_forward.2} parent=0 // pred_check_branch
    %14 = sbr.rel (0) target = $region5
  $region4: #{gru4rec_forward.2} parent=0 // pred_region
    _
  $region5: #{gru4rec_forward.2} parent=0 // pred_fallthru
    _
  // Predicated region
  $region6: #{gru4rec_forward.2} parent=0 // pred_check
    _
  $region7: #{gru4rec_forward.2} parent=0 // pred_check_branch
    %16 = sbr.rel (0) target = $region9
  $region8: #{gru4rec_forward.2} parent=0 // pred_region
    _
  $region9: #{gru4rec_forward.2} parent=0 // pred_fallthru
    _
  // Predicated region
  $region10: #{gru4rec_forward.2} parent=0 // pred_check
    _
  $region11: #{gru4rec_forward.2} parent=0 // pred_check_branch
    %18 = sbr.rel (0) target = $region13
  $region12: #{gru4rec_forward.2} parent=0 // pred_region
    _
  $region13: #{gru4rec_forward.2} parent=0 // pred_fallthru
    _
  // Predicated region
  $region14: #{gru4rec_forward.2} parent=0 // pred_check
    _
  $region15: #{gru4rec_forward.2} parent=0 // pred_check_branch
    %20 = sbr.rel (0) target = $region17
  $region16: #{gru4rec_forward.2} parent=0 // pred_region
    _
  $region17: #{gru4rec_forward.2} parent=0 // pred_fallthru
    _
  // Predicated region
  $region18: #{gru4rec_forward.2} parent=0 // pred_check
    _
  $region19: #{gru4rec_forward.2} parent=0 // pred_check_branch
    %22 = sbr.rel (0) target = $region21
  $region20: #{gru4rec_forward.2} parent=0 // pred_region
    _
  $region21: #{gru4rec_forward.2} parent=0 // pred_fallthru
    _
  // Predicated region
  $region22: #{gru4rec_forward.2} parent=0 // pred_check
    _
  $region23: #{gru4rec_forward.2} parent=0 // pred_check_branch
    %24 = sbr.rel (0) target = $region25
  $region24: #{gru4rec_forward.2} parent=0 // pred_region
    _
  $region25: #{gru4rec_forward.2} parent=0 // pred_fallthru
    _
  %v25 = vld [vmem:[%s0] sm:$0xff]
  %v26 = vld [vmem:[%s1] sm:$0xff]
  %v27 = vld [vmem:[%s2] sm:$0xff]
  %v28 = vld [vmem:[%s2 + $0x8] sm:$0xff]
  %v29 = vld [vmem:[%s2 + $0x10] sm:$0xff]
  %v30 = vld [vmem:[%s2 + $0x18] sm:$0xff]
  %v31 = vld [vmem:[%s2 + $0x20] sm:$0xff]
  %v32 = vld [vmem:[%s2 + $0x28] sm:$0xff]
  %v33 = vld [vmem:[%s2 + $0x30] sm:$0xff]
  %v34 = vld [vmem:[%s2 + $0x38] sm:$0xff]
  %v35 = vld [vmem:[%s2 + $0x40] sm:$0xff]
  %v36 = vld [vmem:[%s2 + $0x48] sm:$0xff]
  %v37 = vld [vmem:[%s2 + $0x50] sm:$0xff]
  %v38 = vld [vmem:[%s2 + $0x58] sm:$0xff]
  %v39 = vld [vmem:[%s2 + $0x60] sm:$0xff]
  %v40 = vld [vmem:[%s2 + $0x68] sm:$0xff]
  %v41 = vld [vmem:[%s2 + $0x70] sm:$0xff]
  %v42 = vld [vmem:[%s2 + $0x78] sm:$0xff]
  %v43 = vld [vmem:[%s2 + $0x80] sm:$0xff]
  %v44 = vld [vmem:[%s2 + $0x88] sm:$0xff]
  %v45 = vld [vmem:[%s2 + $0x90] sm:$0xff]
  %v46 = vld [vmem:[%s2 + $0x98] sm:$0xff]
  %v47 = vld [vmem:[%s2 + $0xa0] sm:$0xff]
  %v48 = vld [vmem:[%s2 + $0xa8] sm:$0xff]
  %v49 = vld [vmem:[%s2 + $0xb0] sm:$0xff]
  %v50 = vld [vmem:[%s2 + $0xb8] sm:$0xff]
  %v51 = vld [vmem:[%s2 + $0xc0] sm:$0xff]
  %v52 = vld [vmem:[%s2 + $0xc8] sm:$0xff]
  %v53 = vld [vmem:[%s2 + $0xd0] sm:$0xff]
  %v54 = vld [vmem:[%s2 + $0xd8] sm:$0xff]
  %v55 = vld [vmem:[%s2 + $0xe0] sm:$0xff]
  %v56 = vld [vmem:[%s2 + $0xe8] sm:$0xff]
  %v57 = vld [vmem:[%s2 + $0xf0] sm:$0xff]
  %v58 = vld [vmem:[%s2 + $0xf8] sm:$0xff]
  %v59 = vld [vmem:[%s2 + $0x100] sm:$0xff]
  %v60 = vld [vmem:[%s2 + $0x108] sm:$0xff]
  %v61 = vld [vmem:[%s2 + $0x110] sm:$0xff]
  %v62 = vld [vmem:[%s2 + $0x118] sm:$0xff]
  %v63 = vld [vmem:[%s2 + $0x120] sm:$0xff]
  %v64 = vld [vmem:[%s2 + $0x128] sm:$0xff]
  %v65 = vld [vmem:[%s2 + $0x130] sm:$0xff]
  %v66 = vld [vmem:[%s2 + $0x138] sm:$0xff]
  %v67 = vld [vmem:[%s2 + $0x140] sm:$0xff]
  %v68 = vld [vmem:[%s2 + $0x148] sm:$0xff]
  %v69 = vld [vmem:[%s2 + $0x150] sm:$0xff]
  %v70 = vld [vmem:[%s2 + $0x158] sm:$0xff]
  %v71 = vld [vmem:[%s2 + $0x160] sm:$0xff]
  %v72 = vld [vmem:[%s2 + $0x168] sm:$0xff]
  %v73 = vld [vmem:[%s2 + $0x170] sm:$0xff]
  %v74 = vld [vmem:[%s2 + $0x178] sm:$0xff]
  %v75 = vld [vmem:[%s4] sm:$0x7]
  %v77 = vlaneseq
  %v78 = vshrl.u32 %v77, 7
  %v79 = vsub.s32 0, %v78
  %v80 = vrot.slane %v75, %v79
  %v81 = vlaneseq
  %v82 = vshrl.u32 %v81, 7
  %v83 = vsub.s32 1, %v82
  %v84 = vrot.slane %v75, %v83
  %v85 = vlaneseq
  %v86 = vshrl.u32 %v85, 7
  %v87 = vsub.s32 2, %v86
  %v88 = vrot.slane %v75, %v87
  %92 = vmatprep.subr.mxu0 %v28
  %93 = vmatpush1.msra.mxu0 %v27
  %94 = vmatprep.subr.mxu0 %v31
  %95 = vmatpush1.msra.mxu0 %v30
  %96 = vmatprep.subr.mxu0 %v34
  %97 = vmatpush1.msra.mxu0 %v33
  %98 = vmatprep.subr.mxu0 %v37
  %99 = vmatpush1.msra.mxu0 %v36
  %100 = vmatprep.subr.mxu0 %v40
  %101 = vmatpush1.msra.mxu0 %v39
  %102 = vmatprep.subr.mxu0 %v43
  %103 = vmatpush1.msra.mxu0 %v42
  %104 = vmatprep.subr.mxu0 %v46
  %105 = vmatpush1.msra.mxu0 %v45
  %106 = vmatprep.subr.mxu0 %v49
  %107 = vmatpush1.msra.mxu0 %v48
  %108 = vmatprep.subr.mxu0 %v52
  %109 = vmatpush1.msra.mxu0 %v51
  %110 = vmatprep.subr.mxu0 %v55
  %111 = vmatpush1.msra.mxu0 %v54
  %112 = vmatprep.subr.mxu0 %v58
  %113 = vmatpush1.msra.mxu0 %v57
  %114 = vmatprep.subr.mxu0 %v61
  %115 = vmatpush1.msra.mxu0 %v60
  %116 = vmatprep.subr.mxu0 %v64
  %117 = vmatpush1.msra.mxu0 %v63
  %118 = vmatprep.subr.mxu0 %v67
  %119 = vmatpush1.msra.mxu0 %v66
  %120 = vmatprep.subr.mxu0 %v70
  %121 = vmatpush1.msra.mxu0 %v69
  %122 = vmatprep.subr.mxu0 %v73
  %123 = vmatpush1.msra.mxu0 %v72
  %124 = vmatprep.subr.mxu0 0.0
  %125 = vmatpush1.msra.mxu0 0.0
  %126 = vmatprep.subr.mxu0 0.0
  %127 = vmatpush1.msra.mxu0 0.0
  %128 = vmatprep.subr.mxu0 0.0
  %129 = vmatpush1.msra.mxu0 0.0
  %130 = vmatprep.subr.mxu0 0.0
  %131 = vmatpush1.msra.mxu0 0.0
  %132 = vmatprep.subr.mxu0 0.0
  %133 = vmatpush1.msra.mxu0 0.0
  %134 = vmatprep.subr.mxu0 0.0
  %135 = vmatpush1.msra.mxu0 0.0
  %136 = vmatprep.subr.mxu0 0.0
  %137 = vmatpush1.msra.mxu0 0.0
  %138 = vmatprep.subr.mxu0 0.0
  %139 = vmatpush1.msra.mxu0 0.0
  %140 = vmatprep.subr.mxu0 0.0
  %141 = vmatpush1.msra.mxu0 0.0
  %142 = vmatprep.subr.mxu0 0.0
  %143 = vmatpush1.msra.mxu0 0.0
  %144 = vmatprep.subr.mxu0 0.0
  %145 = vmatpush1.msra.mxu0 0.0
  %146 = vmatprep.subr.mxu0 0.0
  %147 = vmatpush1.msra.mxu0 0.0
  %148 = vmatprep.subr.mxu0 0.0
  %149 = vmatpush1.msra.mxu0 0.0
  %150 = vmatprep.subr.mxu0 0.0
  %151 = vmatpush1.msra.mxu0 0.0
  %152 = vmatprep.subr.mxu0 0.0
  %153 = vmatpush1.msra.mxu0 0.0
  %154 = vmatprep.subr.mxu0 0.0
  %155 = vmatpush1.msra.mxu0 0.0
  %156 = vmatprep.mubr.f32.mxu0 0.0
  %157 = vmatmul.mubr.f32.gmra.mrb[0].mxu0 %v25
  %v158 = vpop.f32.mrb[0].mxu0
  %v159 = vadd.f32 %v80, %v158
  %v160 = vpop.f32.mrb[0].mxu0
  %v161 = vadd.f32 %v84, %v160
  %162 = vdwg.mxu0
  %163 = vmatprep.subr.mxu0 0.0
  %164 = vmatpush1.msra.mxu0 %v29
  %165 = vmatprep.subr.mxu0 0.0
  %166 = vmatpush1.msra.mxu0 %v32
  %167 = vmatprep.subr.mxu0 0.0
  %168 = vmatpush1.msra.mxu0 %v35
  %169 = vmatprep.subr.mxu0 0.0
  %170 = vmatpush1.msra.mxu0 %v38
  %171 = vmatprep.subr.mxu0 0.0
  %172 = vmatpush1.msra.mxu0 %v41
  %173 = vmatprep.subr.mxu0 0.0
  %174 = vmatpush1.msra.mxu0 %v44
  %175 = vmatprep.subr.mxu0 0.0
  %176 = vmatpush1.msra.mxu0 %v47
  %177 = vmatprep.subr.mxu0 0.0
  %178 = vmatpush1.msra.mxu0 %v50
  %179 = vmatprep.subr.mxu0 0.0
  %180 = vmatpush1.msra.mxu0 %v53
  %181 = vmatprep.subr.mxu0 0.0
  %182 = vmatpush1.msra.mxu0 %v56
  %183 = vmatprep.subr.mxu0 0.0
  %184 = vmatpush1.msra.mxu0 %v59
  %185 = vmatprep.subr.mxu0 0.0
  %186 = vmatpush1.msra.mxu0 %v62
  %187 = vmatprep.subr.mxu0 0.0
  %188 = vmatpush1.msra.mxu0 %v65
  %189 = vmatprep.subr.mxu0 0.0
  %190 = vmatpush1.msra.mxu0 %v68
  %191 = vmatprep.subr.mxu0 0.0
  %192 = vmatpush1.msra.mxu0 %v71
  %193 = vmatprep.subr.mxu0 0.0
  %194 = vmatpush1.msra.mxu0 %v74
  %195 = vmatprep.subr.mxu0 0.0
  %196 = vmatpush1.msra.mxu0 0.0
  %197 = vmatprep.subr.mxu0 0.0
  %198 = vmatpush1.msra.mxu0 0.0
  %199 = vmatprep.subr.mxu0 0.0
  %200 = vmatpush1.msra.mxu0 0.0
  %201 = vmatprep.subr.mxu0 0.0
  %202 = vmatpush1.msra.mxu0 0.0
  %203 = vmatprep.subr.mxu0 0.0
  %204 = vmatpush1.msra.mxu0 0.0
  %205 = vmatprep.subr.mxu0 0.0
  %206 = vmatpush1.msra.mxu0 0.0
  %207 = vmatprep.subr.mxu0 0.0
  %208 = vmatpush1.msra.mxu0 0.0
  %209 = vmatprep.subr.mxu0 0.0
  %210 = vmatpush1.msra.mxu0 0.0
  %211 = vmatprep.subr.mxu0 0.0
  %212 = vmatpush1.msra.mxu0 0.0
  %213 = vmatprep.subr.mxu0 0.0
  %214 = vmatpush1.msra.mxu0 0.0
  %215 = vmatprep.subr.mxu0 0.0
  %216 = vmatpush1.msra.mxu0 0.0
  %217 = vmatprep.subr.mxu0 0.0
  %218 = vmatpush1.msra.mxu0 0.0
  %219 = vmatprep.subr.mxu0 0.0
  %220 = vmatpush1.msra.mxu0 0.0
  %221 = vmatprep.subr.mxu0 0.0
  %222 = vmatpush1.msra.mxu0 0.0
  %223 = vmatprep.subr.mxu0 0.0
  %224 = vmatpush1.msra.mxu0 0.0
  %225 = vmatprep.subr.mxu0 0.0
  %226 = vmatpush1.msra.mxu0 0.0
  %227 = vmatprep.mubr.f32.mxu0 0.0
  %228 = vmatmul.mubr.f32.gmra.mrb[0].mxu0 %v25
  %v229 = vpop.f32.mrb[0].mxu0
  %v230 = vadd.f32 %v88, %v229
  %v231 = vpop.f32.mrb[0].mxu0
  %232 = vdwg.mxu0
  %v233 = vld [vmem:[%s3] sm:$0xff]
  %v234 = vld [vmem:[%s3 + $0x8] sm:$0xff]
  %v235 = vld [vmem:[%s3 + $0x10] sm:$0xff]
  %v236 = vld [vmem:[%s3 + $0x18] sm:$0xff]
  %v237 = vld [vmem:[%s3 + $0x20] sm:$0xff]
  %v238 = vld [vmem:[%s3 + $0x28] sm:$0xff]
  %v239 = vld [vmem:[%s3 + $0x30] sm:$0xff]
  %v240 = vld [vmem:[%s3 + $0x38] sm:$0xff]
  %v241 = vld [vmem:[%s3 + $0x40] sm:$0xff]
  %v242 = vld [vmem:[%s3 + $0x48] sm:$0xff]
  %v243 = vld [vmem:[%s3 + $0x50] sm:$0xff]
  %v244 = vld [vmem:[%s3 + $0x58] sm:$0xff]
  %v245 = vld [vmem:[%s3 + $0x60] sm:$0xff]
  %v246 = vld [vmem:[%s3 + $0x68] sm:$0xff]
  %v247 = vld [vmem:[%s3 + $0x70] sm:$0xff]
  %v248 = vld [vmem:[%s3 + $0x78] sm:$0xff]
  %v249 = vld [vmem:[%s3 + $0x80] sm:$0xff]
  %v250 = vld [vmem:[%s3 + $0x88] sm:$0xff]
  %v251 = vld [vmem:[%s3 + $0x90] sm:$0xff]
  %v252 = vld [vmem:[%s3 + $0x98] sm:$0xff]
  %v253 = vld [vmem:[%s3 + $0xa0] sm:$0xff]
  %v254 = vld [vmem:[%s3 + $0xa8] sm:$0xff]
  %v255 = vld [vmem:[%s3 + $0xb0] sm:$0xff]
  %v256 = vld [vmem:[%s3 + $0xb8] sm:$0xff]
  %v257 = vld [vmem:[%s3 + $0xc0] sm:$0xff]
  %v258 = vld [vmem:[%s3 + $0xc8] sm:$0xff]
  %v259 = vld [vmem:[%s3 + $0xd0] sm:$0xff]
  %v260 = vld [vmem:[%s3 + $0xd8] sm:$0xff]
  %v261 = vld [vmem:[%s3 + $0xe0] sm:$0xff]
  %v262 = vld [vmem:[%s3 + $0xe8] sm:$0xff]
  %v263 = vld [vmem:[%s3 + $0xf0] sm:$0xff]
  %v264 = vld [vmem:[%s3 + $0xf8] sm:$0xff]
  %v265 = vld [vmem:[%s3 + $0x100] sm:$0xff]
  %v266 = vld [vmem:[%s3 + $0x108] sm:$0xff]
  %v267 = vld [vmem:[%s3 + $0x110] sm:$0xff]
  %v268 = vld [vmem:[%s3 + $0x118] sm:$0xff]
  %v269 = vld [vmem:[%s3 + $0x120] sm:$0xff]
  %v270 = vld [vmem:[%s3 + $0x128] sm:$0xff]
  %v271 = vld [vmem:[%s3 + $0x130] sm:$0xff]
  %v272 = vld [vmem:[%s3 + $0x138] sm:$0xff]
  %v273 = vld [vmem:[%s3 + $0x140] sm:$0xff]
  %v274 = vld [vmem:[%s3 + $0x148] sm:$0xff]
  %v275 = vld [vmem:[%s3 + $0x150] sm:$0xff]
  %v276 = vld [vmem:[%s3 + $0x158] sm:$0xff]
  %v277 = vld [vmem:[%s3 + $0x160] sm:$0xff]
  %v278 = vld [vmem:[%s3 + $0x168] sm:$0xff]
  %v279 = vld [vmem:[%s3 + $0x170] sm:$0xff]
  %v280 = vld [vmem:[%s3 + $0x178] sm:$0xff]
  %v281 = vld [vmem:[%s5] sm:$0x7]
  %v283 = vlaneseq
  %v284 = vshrl.u32 %v283, 7
  %v285 = vsub.s32 0, %v284
  %v286 = vrot.slane %v281, %v285
  %v287 = vlaneseq
  %v288 = vshrl.u32 %v287, 7
  %v289 = vsub.s32 1, %v288
  %v290 = vrot.slane %v281, %v289
  %v291 = vlaneseq
  %v292 = vshrl.u32 %v291, 7
  %v293 = vsub.s32 2, %v292
  %v294 = vrot.slane %v281, %v293
  %298 = vmatprep.subr.mxu0 %v234
  %299 = vmatpush1.msra.mxu0 %v233
  %300 = vmatprep.subr.mxu0 %v237
  %301 = vmatpush1.msra.mxu0 %v236
  %302 = vmatprep.subr.mxu0 %v240
  %303 = vmatpush1.msra.mxu0 %v239
  %304 = vmatprep.subr.mxu0 %v243
  %305 = vmatpush1.msra.mxu0 %v242
  %306 = vmatprep.subr.mxu0 %v246
  %307 = vmatpush1.msra.mxu0 %v245
  %308 = vmatprep.subr.mxu0 %v249
  %309 = vmatpush1.msra.mxu0 %v248
  %310 = vmatprep.subr.mxu0 %v252
  %311 = vmatpush1.msra.mxu0 %v251
  %312 = vmatprep.subr.mxu0 %v255
  %313 = vmatpush1.msra.mxu0 %v254
  %314 = vmatprep.subr.mxu0 %v258
  %315 = vmatpush1.msra.mxu0 %v257
  %316 = vmatprep.subr.mxu0 %v261
  %317 = vmatpush1.msra.mxu0 %v260
  %318 = vmatprep.subr.mxu0 %v264
  %319 = vmatpush1.msra.mxu0 %v263
  %320 = vmatprep.subr.mxu0 %v267
  %321 = vmatpush1.msra.mxu0 %v266
  %322 = vmatprep.subr.mxu0 %v270
  %323 = vmatpush1.msra.mxu0 %v269
  %324 = vmatprep.subr.mxu0 %v273
  %325 = vmatpush1.msra.mxu0 %v272
  %326 = vmatprep.subr.mxu0 %v276
  %327 = vmatpush1.msra.mxu0 %v275
  %328 = vmatprep.subr.mxu0 %v279
  %329 = vmatpush1.msra.mxu0 %v278
  %330 = vmatprep.subr.mxu0 0.0
  %331 = vmatpush1.msra.mxu0 0.0
  %332 = vmatprep.subr.mxu0 0.0
  %333 = vmatpush1.msra.mxu0 0.0
  %334 = vmatprep.subr.mxu0 0.0
  %335 = vmatpush1.msra.mxu0 0.0
  %336 = vmatprep.subr.mxu0 0.0
  %337 = vmatpush1.msra.mxu0 0.0
  %338 = vmatprep.subr.mxu0 0.0
  %339 = vmatpush1.msra.mxu0 0.0
  %340 = vmatprep.subr.mxu0 0.0
  %341 = vmatpush1.msra.mxu0 0.0
  %342 = vmatprep.subr.mxu0 0.0
  %343 = vmatpush1.msra.mxu0 0.0
  %344 = vmatprep.subr.mxu0 0.0
  %345 = vmatpush1.msra.mxu0 0.0
  %346 = vmatprep.subr.mxu0 0.0
  %347 = vmatpush1.msra.mxu0 0.0
  %348 = vmatprep.subr.mxu0 0.0
  %349 = vmatpush1.msra.mxu0 0.0
  %350 = vmatprep.subr.mxu0 0.0
  %351 = vmatpush1.msra.mxu0 0.0
  %352 = vmatprep.subr.mxu0 0.0
  %353 = vmatpush1.msra.mxu0 0.0
  %354 = vmatprep.subr.mxu0 0.0
  %355 = vmatpush1.msra.mxu0 0.0
  %356 = vmatprep.subr.mxu0 0.0
  %357 = vmatpush1.msra.mxu0 0.0
  %358 = vmatprep.subr.mxu0 0.0
  %359 = vmatpush1.msra.mxu0 0.0
  %360 = vmatprep.subr.mxu0 0.0
  %361 = vmatpush1.msra.mxu0 0.0
  %362 = vmatprep.mubr.f32.mxu0 0.0
  %363 = vmatmul.mubr.f32.gmra.mrb[0].mxu0 %v26
  %v364 = vpop.f32.mrb[0].mxu0
  %v365 = vadd.f32 %v286, %v364
  %v366 = vpop.f32.mrb[0].mxu0
  %v367 = vadd.f32 %v290, %v366
  %368 = vdwg.mxu0
  %369 = vmatprep.subr.mxu0 0.0
  %370 = vmatpush1.msra.mxu0 %v235
  %371 = vmatprep.subr.mxu0 0.0
  %372 = vmatpush1.msra.mxu0 %v238
  %373 = vmatprep.subr.mxu0 0.0
  %374 = vmatpush1.msra.mxu0 %v241
  %375 = vmatprep.subr.mxu0 0.0
  %376 = vmatpush1.msra.mxu0 %v244
  %377 = vmatprep.subr.mxu0 0.0
  %378 = vmatpush1.msra.mxu0 %v247
  %379 = vmatprep.subr.mxu0 0.0
  %380 = vmatpush1.msra.mxu0 %v250
  %381 = vmatprep.subr.mxu0 0.0
  %382 = vmatpush1.msra.mxu0 %v253
  %383 = vmatprep.subr.mxu0 0.0
  %384 = vmatpush1.msra.mxu0 %v256
  %385 = vmatprep.subr.mxu0 0.0
  %386 = vmatpush1.msra.mxu0 %v259
  %387 = vmatprep.subr.mxu0 0.0
  %388 = vmatpush1.msra.mxu0 %v262
  %389 = vmatprep.subr.mxu0 0.0
  %390 = vmatpush1.msra.mxu0 %v265
  %391 = vmatprep.subr.mxu0 0.0
  %392 = vmatpush1.msra.mxu0 %v268
  %393 = vmatprep.subr.mxu0 0.0
  %394 = vmatpush1.msra.mxu0 %v271
  %395 = vmatprep.subr.mxu0 0.0
  %396 = vmatpush1.msra.mxu0 %v274
  %397 = vmatprep.subr.mxu0 0.0
  %398 = vmatpush1.msra.mxu0 %v277
  %399 = vmatprep.subr.mxu0 0.0
  %400 = vmatpush1.msra.mxu0 %v280
  %401 = vmatprep.subr.mxu0 0.0
  %402 = vmatpush1.msra.mxu0 0.0
  %403 = vmatprep.subr.mxu0 0.0
  %404 = vmatpush1.msra.mxu0 0.0
  %405 = vmatprep.subr.mxu0 0.0
  %406 = vmatpush1.msra.mxu0 0.0
  %407 = vmatprep.subr.mxu0 0.0
  %408 = vmatpush1.msra.mxu0 0.0
  %409 = vmatprep.subr.mxu0 0.0
  %410 = vmatpush1.msra.mxu0 0.0
  %411 = vmatprep.subr.mxu0 0.0
  %412 = vmatpush1.msra.mxu0 0.0
  %413 = vmatprep.subr.mxu0 0.0
  %414 = vmatpush1.msra.mxu0 0.0
  %415 = vmatprep.subr.mxu0 0.0
  %416 = vmatpush1.msra.mxu0 0.0
  %417 = vmatprep.subr.mxu0 0.0
  %418 = vmatpush1.msra.mxu0 0.0
  %419 = vmatprep.subr.mxu0 0.0
  %420 = vmatpush1.msra.mxu0 0.0
  %421 = vmatprep.subr.mxu0 0.0
  %422 = vmatpush1.msra.mxu0 0.0
  %423 = vmatprep.subr.mxu0 0.0
  %424 = vmatpush1.msra.mxu0 0.0
  %425 = vmatprep.subr.mxu0 0.0
  %426 = vmatpush1.msra.mxu0 0.0
  %427 = vmatprep.subr.mxu0 0.0
  %428 = vmatpush1.msra.mxu0 0.0
  %429 = vmatprep.subr.mxu0 0.0
  %430 = vmatpush1.msra.mxu0 0.0
  %431 = vmatprep.subr.mxu0 0.0
  %432 = vmatpush1.msra.mxu0 0.0
  %433 = vmatprep.mubr.f32.mxu0 0.0
  %434 = vmatmul.mubr.f32.gmra.mrb[0].mxu0 %v26
  %v435 = vpop.f32.mrb[0].mxu0
  %v436 = vadd.f32 %v294, %v435
  %v437 = vpop.f32.mrb[0].mxu0
  %438 = vdwg.mxu0
  %v439 = vadd.f32 %v159, %v365
  %v440 = vxor.u32 %v439, 2147483648
  %v441 = vmul.f32 %v440, 1.442695
  %v442 = vpow.pop %v441
  %v443 = vadd.f32 %v442, 1.0
  %v444 = vrcp.pop %v443
  %v445 = vmul.f32 1.0, %v444
  %v446 = vadd.f32 %v161, %v367
  %v447 = vxor.u32 %v446, 2147483648
  %v448 = vmul.f32 %v447, 1.442695
  %v449 = vpow.pop %v448
  %v450 = vadd.f32 %v449, 1.0
  %v451 = vrcp.pop %v450
  %v452 = vmul.f32 1.0, %v451
  %v453 = vmul.f32 %v445, %v436
  %v454 = vadd.f32 %v230, %v453
  %v455 = vtanh.pop %v454
  %v456 = vsub.f32 %v26, %v455
  %v457 = vmul.f32 %v452, %v456
  %v458 = vadd.f32 %v455, %v457
  %459 = vst [vmem:[%s6] sm:$0xff] %v458
  %460 = vst [vmem:[%s7] sm:$0xff] %v458
  // Predicated region
  $region26: #{gru4rec_forward.2} parent=0 // pred_check
    _
  $region27: #{gru4rec_forward.2} parent=0 // pred_check_branch
    %462 = sbr.rel (0) target = $region29
  $region28: #{gru4rec_forward.2} parent=0 // pred_region
    _
  $region29: #{gru4rec_forward.2} parent=0 // pred_fallthru
    _
  // Predicated region
  $region30: #{gru4rec_forward.2} parent=0 // pred_check
    _
  $region31: #{gru4rec_forward.2} parent=0 // pred_check_branch
    %464 = sbr.rel (0) target = $region33
  $region32: #{gru4rec_forward.2} parent=0 // pred_region
    _
  $region33: #{gru4rec_forward.2} parent=0 // pred_fallthru
    _
  // Predicated region
  $region34: #{gru4rec_forward.2} parent=0 // pred_check
    _
  $region35: #{gru4rec_forward.2} parent=0 // pred_check_branch
    %466 = sbr.rel (0) target = $region37
  $region36: #{gru4rec_forward.2} parent=0 // pred_region
    _
  $region37: #{gru4rec_forward.2} parent=0 // pred_fallthru
    _
  // Predicated region
  $region38: #{gru4rec_forward.2} parent=0 // pred_check
    _
  $region39: #{gru4rec_forward.2} parent=0 // pred_check_branch
    %468 = sbr.rel (0) target = $region41
  $region40: #{gru4rec_forward.2} parent=0 // pred_region
    _
  $region41: #{gru4rec_forward.2} parent=0 // pred_fallthru
    _

</llo_original>
